<compile_context>
chip_gen: v7x
topology: tpu7x:2x2x1
jax: 0.10.0
libtpu: 0.0.40
codegen_flags: <defaults>
</compile_context>

<pallas_src>
import functools

import jax
import jax.numpy as jnp
from jax.experimental import pallas as pl
from jax.experimental.pallas import tpu as pltpu


# ----------------------------------------------------------------------------
# small static helpers
# ----------------------------------------------------------------------------
def _cdiv(a, b):
    return -(-a // b)


def _round_up(a, m):
    return _cdiv(a, m) * m


def _row_tile(rows, max_rows):
    """Pick a row-tile (multiple of 8 or full extent) and padded row count."""
    if rows <= max_rows:
        return rows, rows
    rt = max_rows - (max_rows % 8)
    while rt >= 8:
        if rows % rt == 0:
            return rt, rows
        rt -= 8
    return max_rows, _round_up(rows, max_rows)


# ----------------------------------------------------------------------------
# Pallas kernel 1: fused conv = per-tap shifted matmul + folded BN/bias/act
# ----------------------------------------------------------------------------
def _conv_tap_kernel(x_ref, w_ref, s_ref, c_ref, o_ref, acc_ref, *, offs, act):
    """x_ref: (RI, Cp) bf16 flattened padded image; w_ref: (T, Cp, OCp) bf16;
    s_ref/c_ref: (1, OCp) f32 folded scale / bias; o_ref: (RO, OCp); acc: f32."""
    ro = acc_ref.shape[0]
    acc_ref[...] = jnp.zeros_like(acc_ref)
    for t, off in enumerate(offs):           # static unrolled tap loop (<=16 taps)
        acc_ref[...] += jnp.dot(x_ref[pl.ds(off, ro), :], w_ref[t],
                                preferred_element_type=jnp.float32)
    y = acc_ref[...] * s_ref[...] + c_ref[...]
    if act == "relu":
        y = jnp.maximum(y, 0.0)
    elif act == "lrelu":
        y = jnp.where(y >= 0.0, y, 0.2 * y)
    o_ref[...] = y.astype(o_ref.dtype)


def pack_conv(w, b=None, gamma=None, *, stride=1, padding=1, act="none", bn_eps=1e-5):
    """w: (OC, IC, KH, KW) torch-layout weights -> per-tap (T, Cp, OCp) bf16 plus
    folded eval-mode BatchNorm scale / bias (running mean=0, var=1, beta=0)."""
    OC, IC, KH, KW = w.shape
    if stride == 1:
        assert KH == KW
        wt = jnp.transpose(w, (2, 3, 1, 0)).reshape(KH * KW, IC, OC)
        c_eff, keff = IC, KH
    elif stride == 2:
        assert KH == 4 and KW == 4, "stride-2 path assumes 4x4 kernels"
        # space-to-depth phases: stride-2 4x4 conv == stride-1 2x2 conv on 4C phases
        w_ = jnp.transpose(w, (2, 3, 1, 0)).reshape(2, 2, 2, 2, IC, OC)  # (a,da,b,db,ic,oc)
        wt = jnp.transpose(w_, (0, 2, 1, 3, 4, 5)).reshape(4, 4 * IC, OC)
        c_eff, keff = 4 * IC, 2
    else:
        raise NotImplementedError(stride)
    cp = _round_up(c_eff, 8)
    ocp = OC if OC >= 64 else 128
    wt = jnp.pad(wt, ((0, 0), (0, cp - c_eff), (0, ocp - OC))).astype(jnp.bfloat16)
    # general fold: y = (acc + conv_bias - mean) * gamma/sqrt(var+eps) + beta
    mean = jnp.zeros((OC,), jnp.float32)
    var = jnp.ones((OC,), jnp.float32)
    beta = jnp.zeros((OC,), jnp.float32)
    scale = (jnp.ones((OC,), jnp.float32) if gamma is None
             else gamma.astype(jnp.float32) / jnp.sqrt(var + bn_eps))
    cbias = jnp.zeros((OC,), jnp.float32) if b is None else b.astype(jnp.float32)
    bias_eff = (cbias - mean) * scale + beta
    return dict(
        w=wt,
        s=jnp.pad(scale.reshape(1, OC), ((0, 0), (0, ocp - OC))),
        c=jnp.pad(bias_eff.reshape(1, OC), ((0, 0), (0, ocp - OC))),
        oc=OC, ocp=ocp, cp=cp, keff=keff, kh=KH, kw=KW,
        stride=stride, padding=padding, act=act,
    )


def conv2d_fused(x, pw, *, out_dtype=jnp.bfloat16):
    """x: (B, H, W, C) NHWC; returns (B, OH, OW, OC) in out_dtype (NHWC)."""
    B, H, W, C = x.shape
    p, s = pw["padding"], pw["stride"]
    OH = (H + 2 * p - pw["kh"]) // s + 1
    OW = (W + 2 * p - pw["kw"]) // s + 1
    keff, Cp, OCp, OC = pw["keff"], pw["cp"], pw["ocp"], pw["oc"]

    xp = jnp.pad(x.astype(jnp.bfloat16), ((0, 0), (p, p), (p, p), (0, 0)))
    if s == 2:
        Hp, Wp = xp.shape[1], xp.shape[2]
        if Hp % 2:
            xp = jnp.pad(xp, ((0, 0), (0, 1), (0, 0), (0, 0)))
        if Wp % 2:
            xp = jnp.pad(xp, ((0, 0), (0, 0), (0, 1), (0, 0)))
        Hp, Wp = xp.shape[1], xp.shape[2]
        xp = xp.reshape(B, Hp // 2, 2, Wp // 2, 2, C)
        xp = xp.transpose(0, 1, 3, 2, 4, 5).reshape(B, Hp // 2, Wp // 2, 4 * C)

    _, Hc, Wc, Cc = xp.shape
    OHc, OWc = Hc - keff + 1, Wc - keff + 1
    RO = _round_up(OHc * Wc, 8)                        # flattened output rows / image
    halo = (keff - 1) * Wc + (keff - 1)                # max tap shift
    RI = _round_up(max(Hc * Wc, RO + halo), 8)         # flattened input rows / image

    xf = xp.reshape(B, Hc * Wc, Cc)
    xf = jnp.pad(xf, ((0, 0), (0, RI - Hc * Wc), (0, Cp - Cc)))

    offs = tuple(kh * Wc + kw for kh in range(keff) for kw in range(keff))
    T = pw["w"].shape[0]

    out = pl.pallas_call(
        functools.partial(_conv_tap_kernel, offs=offs, act=pw["act"]),
        out_shape=jax.ShapeDtypeStruct((B, RO, OCp), out_dtype),
        grid=(B,),
        in_specs=[
            pl.BlockSpec((None, RI, Cp), lambda b: (b, 0, 0)),      # image (pipelined)
            pl.BlockSpec((T, Cp, OCp), lambda b: (0, 0, 0)),        # weights: fetched once
            pl.BlockSpec((1, OCp), lambda b: (0, 0)),               # scale:   fetched once
            pl.BlockSpec((1, OCp), lambda b: (0, 0)),               # bias:    fetched once
        ],
        out_specs=pl.BlockSpec((None, RO, OCp), lambda b: (b, 0, 0)),
        scratch_shapes=[pltpu.VMEM((RO, OCp), jnp.float32)],
        compiler_params=pltpu.CompilerParams(dimension_semantics=("parallel",)),
    )(xf, pw["w"], pw["s"], pw["c"])

    out = out[:, :OHc * Wc, :].reshape(B, OHc, Wc, OCp)
    return out[:, :OH, :OW, :OC]


# ----------------------------------------------------------------------------
# Pallas kernel 2: sum of |a - b| (per-block partials, parallel grid)
# ----------------------------------------------------------------------------
def _abssum_kernel(a_ref, b_ref, o_ref):
    d = jnp.abs(a_ref[...].astype(jnp.float32) - b_ref[...].astype(jnp.float32))
    o_ref[...] = jnp.sum(d, axis=0, keepdims=True)


def abs_diff_sum(a, b, *, max_rows=1024):
    af = a.reshape(-1)
    bf = b.reshape(-1)
    n = int(af.shape[0])
    nrow = _cdiv(n, 128)
    rt, nrow_p = _row_tile(nrow, max_rows)
    npad = nrow_p * 128
    if npad != n:  # fallback only; no copy when shapes already divide
        af = jnp.pad(af, (0, npad - n))
        bf = jnp.pad(bf, (0, npad - n))
    af = af.reshape(nrow_p, 128)
    bf = bf.reshape(nrow_p, 128)
    G = nrow_p // rt
    parts = pl.pallas_call(
        _abssum_kernel,
        out_shape=jax.ShapeDtypeStruct((G, 128), jnp.float32),
        grid=(G,),
        in_specs=[pl.BlockSpec((rt, 128), lambda i: (i, 0)),
                  pl.BlockSpec((rt, 128), lambda i: (i, 0))],
        out_specs=pl.BlockSpec((1, 128), lambda i: (i, 0)),
        compiler_params=pltpu.CompilerParams(dimension_semantics=("parallel",)),
    )(af, bf)
    return jnp.sum(parts)


# ----------------------------------------------------------------------------
# Pallas kernel 3: logits statistics (sum / hinge sums); mask built in-kernel,
# per-block partial outputs.
# ----------------------------------------------------------------------------
def _logit_stats_kernel(x_ref, s_ref, hr_ref, hf_ref, *, n_valid):
    i = pl.program_id(0)
    rt, nc = x_ref.shape
    base = i * rt * nc
    idx = (base
           + jax.lax.broadcasted_iota(jnp.int32, (rt, nc), 0) * nc
           + jax.lax.broadcasted_iota(jnp.int32, (rt, nc), 1))
    valid = idx < n_valid
    x = x_ref[...].astype(jnp.float32)
    zero = jnp.zeros_like(x)
    s_ref[...] = jnp.sum(jnp.where(valid, x, zero), axis=(0, 1), keepdims=True)
    hr_ref[...] = jnp.sum(jnp.where(valid, jnp.maximum(1.0 - x, 0.0), zero),
                          axis=(0, 1), keepdims=True)
    hf_ref[...] = jnp.sum(jnp.where(valid, jnp.maximum(1.0 + x, 0.0), zero),
                          axis=(0, 1), keepdims=True)


def logit_stats(x, *, max_rows=1024):
    """Returns (sum, sum(relu(1-x)), sum(relu(1+x)), count) over all elements."""
    xf = x.reshape(-1)
    n = int(xf.shape[0])
    nrow = _cdiv(n, 128)
    rt, nrow_p = _row_tile(nrow, max_rows)
    npad = nrow_p * 128
    if npad != n:
        xf = jnp.pad(xf, (0, npad - n))
    xp = xf.reshape(nrow_p, 128)
    G = nrow_p // rt
    outs = pl.pallas_call(
        functools.partial(_logit_stats_kernel, n_valid=n),
        out_shape=tuple(jax.ShapeDtypeStruct((G, 1), jnp.float32) for _ in range(3)),
        grid=(G,),
        in_specs=[pl.BlockSpec((rt, 128), lambda i: (i, 0))],
        out_specs=tuple(pl.BlockSpec((1, 1), lambda i: (i, 0)) for _ in range(3)),
        compiler_params=pltpu.CompilerParams(dimension_semantics=("parallel",)),
    )(xp)
    s, hr, hf = (jnp.sum(o) for o in outs)
    return s, hr, hf, float(n)


# ----------------------------------------------------------------------------
# Pallas kernel 4: fused LPIPS head (normalize + diff^2 + weighted C-reduce + sum)
# ----------------------------------------------------------------------------
def _lpips_head_kernel(f0_ref, f1_ref, w_ref, o_ref):
    f0 = f0_ref[...].astype(jnp.float32)
    f1 = f1_ref[...].astype(jnp.float32)
    inv0 = pl.reciprocal(
        jnp.sqrt(jnp.sum(f0 * f0, axis=1, keepdims=True)) + 1e-10, approx=True)
    inv1 = pl.reciprocal(
        jnp.sqrt(jnp.sum(f1 * f1, axis=1, keepdims=True)) + 1e-10, approx=True)
    d = f0 * inv0 - f1 * inv1
    o_ref[...] = jnp.sum(d * d * w_ref[...], axis=(0, 1), keepdims=True)


def lpips_head_sum(fcat, lw, M, *, max_rows=512):
    """fcat: (2M, C) bf16 features ([f0; f1]); lw: (1, C) f32 head weights."""
    C = int(fcat.shape[1])
    rt, Mp = _row_tile(M, max_rows)
    if Mp != M:  # fallback; avoided when M divides (powers of two here)
        f0 = jnp.pad(fcat[:M], ((0, Mp - M), (0, 0)))
        f1 = jnp.pad(fcat[M:], ((0, Mp - M), (0, 0)))
        fcat = jnp.concatenate([f0, f1], axis=0)
    G = Mp // rt
    parts = pl.pallas_call(
        _lpips_head_kernel,
        out_shape=jax.ShapeDtypeStruct((G, 1), jnp.float32),
        grid=(G,),
        in_specs=[pl.BlockSpec((rt, C), lambda i: (i, 0)),
                  pl.BlockSpec((rt, C), lambda i, G=G: (i + G, 0)),
                  pl.BlockSpec((1, C), lambda i: (0, 0))],
        out_specs=pl.BlockSpec((1, 1), lambda i: (i, 0)),
        compiler_params=pltpu.CompilerParams(dimension_semantics=("parallel",)),
    )(fcat, fcat, lw)
    return jnp.sum(parts)


# ----------------------------------------------------------------------------
# NLayerDiscriminator (PatchGAN), weights_init semantics, eval-mode BatchNorm
# ----------------------------------------------------------------------------
def make_disc_params(key, input_nc=3, ndf=64, n_layers=3):
    specs = [(input_nc, ndf, 2, True, False)]
    nf = ndf
    for n in range(1, n_layers):
        nf_prev, nf = nf, min(2 ** n, 8) * ndf
        specs.append((nf_prev, nf, 2, False, True))
    nf_prev, nf = nf, min(2 ** n_layers, 8) * ndf
    specs.append((nf_prev, nf, 1, False, True))
    specs.append((nf, 1, 1, True, False))
    packed, last = [], len(specs) - 1
    for li, (ic, oc, st, use_b, use_bn) in enumerate(specs):
        key, kw_, kg = jax.random.split(key, 3)
        w = 0.02 * jax.random.normal(kw_, (oc, ic, 4, 4), jnp.float32)
        b = jnp.zeros((oc,), jnp.float32) if use_b else None
        gamma = (1.0 + 0.02 * jax.random.normal(kg, (oc,), jnp.float32)) if use_bn else None
        packed.append(pack_conv(w, b, gamma, stride=st, padding=1,
                                act=("none" if li == last else "lrelu")))
    return packed


def run_discriminator(params, x_nhwc):
    x = x_nhwc
    n = len(params)
    for i, pw in enumerate(params):
        last = i == n - 1
        x = conv2d_fused(x, pw, out_dtype=(jnp.float32 if last else jnp.bfloat16))
    return x  # (B, h', w', 1) f32 logits


# ----------------------------------------------------------------------------
# LPIPS (VGG16 features + fused linear heads) with synthetic deterministic weights
# ----------------------------------------------------------------------------
_VGG_CFG = (64, 64, "M", 128, 128, "M", 256, 256, 256, "M",
            512, 512, 512, "M", 512, 512, 512)
_TAP_CONV = (2, 4, 7, 10, 13)          # relu1_2, relu2_2, relu3_3, relu4_3, relu5_3
_LIN_CH = (64, 128, 256, 512, 512)
_LPIPS_SHIFT = jnp.array([-0.030, -0.088, -0.188], jnp.float32).reshape(1, 1, 1, 3)
_LPIPS_SCALE = jnp.array([0.458, 0.448, 0.450], jnp.float32).reshape(1, 1, 1, 3)


def make_vgg_params(key):
    packed, ic = [], 3
    for v in _VGG_CFG:
        if v == "M":
            packed.append(None)
            continue
        key, k1 = jax.random.split(key)
        w = 0.05 * jax.random.normal(k1, (v, ic, 3, 3), jnp.float32)
        b = jnp.zeros((v,), jnp.float32)
        packed.append(pack_conv(w, b, None, stride=1, padding=1, act="relu"))
        ic = v
    return packed


def make_lin_params(key):
    lins = []
    for c in _LIN_CH:
        key, k1 = jax.random.split(key)
        lins.append(jnp.abs(0.01 * jax.random.normal(k1, (1, c), jnp.float32)))
    return lins


def _vgg_features(params, x):
    feats, conv_i = [], 0
    for pw in params:
        if pw is None:  # MaxPool2d(2, 2) in NHWC
            B, H, W, C = x.shape
            x = x.reshape(B, H // 2, 2, W // 2, 2, C).max(axis=(2, 4))
            continue
        x = conv2d_fused(x, pw)
        conv_i += 1
        if conv_i in _TAP_CONV:
            feats.append(x)
    return feats


def lpips(vgg_params, lin_params, x0_nhwc, x1_nhwc):
    """Returns the batch-mean LPIPS distance (the reference forward takes .mean())."""
    x0s = (x0_nhwc - _LPIPS_SHIFT) / _LPIPS_SCALE
    x1s = (x1_nhwc - _LPIPS_SHIFT) / _LPIPS_SCALE
    B = x0_nhwc.shape[0]
    # Single batched VGG pass for both images (2x weight reuse per conv).
    xcat = jnp.concatenate([x0s, x1s], axis=0).astype(jnp.bfloat16)
    feats = _vgg_features(vgg_params, xcat)
    total = jnp.float32(0.0)
    for f, lw in zip(feats, lin_params):
        BB, Ht, Wt, C = f.shape
        M = (BB // 2) * Ht * Wt
        fm = f.reshape(BB * Ht * Wt, C)
        # mean_b sum_tap mean_hw == sum_tap (sum over all rows) / (B*Ht*Wt)
        total = total + lpips_head_sum(fm, lw, M) / float(M)
    return total


# ----------------------------------------------------------------------------
# GeneralLPIPSWithDiscriminator.forward (eval mode)
# ----------------------------------------------------------------------------
def general_lpips_disc_forward(params, inputs, reconstructions, *, optimizer_idx,
                               global_step, regularization_log, split="train",
                               last_layer=None, frame_key=None):
    del global_step, last_layer  # eval mode: gating bypassed, d_weight = 1.0
    cfg = params["cfg"]
    B, C, T, H, W = inputs.shape
    # 'b c t h w -> (b t) h w c'  (NHWC, single transpose at the boundary)
    rec_nhwc = jnp.transpose(reconstructions, (0, 2, 3, 4, 1)).reshape(B * T, H, W, C)

    if optimizer_idx == 0:
        sum_abs = abs_diff_sum(inputs, reconstructions)
        numel = float(inputs.size)
        pw_ = cfg["perceptual_weight"]

        # pick one random frame per video (randn + topk(1) semantics)
        scores = jax.random.normal(frame_key, (B, T))
        fidx = jnp.argmax(scores, axis=-1)
        inp_frames = inputs[jnp.arange(B), :, fidx]          # (B, C, H, W)
        rec_frames = reconstructions[jnp.arange(B), :, fidx]
        inp_fr = jnp.transpose(inp_frames, (0, 2, 3, 1))     # NHWC
        rec_fr = jnp.transpose(rec_frames, (0, 2, 3, 1))
        p_loss = lpips(params["vgg"], params["lins"], inp_fr, rec_fr)

        logvar = params["logvar"]
        rec_loss_mean = sum_abs / numel + pw_ * p_loss
        # nll = rec_loss / exp(logvar) + logvar ; sum / shape[0]
        nll_sum = (sum_abs + numel * pw_ * p_loss) / jnp.exp(logvar) + numel * logvar
        n0 = B * T
        nll_loss = nll_sum / n0
        weighted_nll_loss = nll_loss                         # weights is None

        logits_fake = run_discriminator(params["disc"], rec_nhwc)
        s_f, _, _, cnt_f = logit_stats(logits_fake)
        g_loss = -(s_f / cnt_f)
        d_weight = jnp.float32(1.0)                          # eval mode

        loss = weighted_nll_loss + d_weight * cfg["disc_factor"] * g_loss
        log = {}
        for k, v in regularization_log.items():
            if k in cfg["regularization_weights"]:
                loss = loss + cfg["regularization_weights"][k] * v
            if k in cfg["additional_log_keys"]:
                log[f"{split}/{k}"] = jnp.mean(v.astype(jnp.float32))
        log.update({
            f"{split}/loss/total": loss,
            f"{split}/loss/nll": nll_loss,
            f"{split}/loss/rec": rec_loss_mean,
            f"{split}/loss/percep": p_loss,
            f"{split}/loss/g": g_loss,
            f"{split}/scalars/logvar": logvar,
            f"{split}/scalars/d_weight": d_weight,
        })
        return loss, log

    elif optimizer_idx == 1:
        inp_nhwc = jnp.transpose(inputs, (0, 2, 3, 4, 1)).reshape(B * T, H, W, C)
        # Single batched discriminator pass over [real; fake] (2x weight reuse).
        logits = run_discriminator(params["disc"],
                                   jnp.concatenate([inp_nhwc, rec_nhwc], axis=0))
        half = B * T
        logits_real, logits_fake = logits[:half], logits[half:]
        s_r, hinge_r, _, cnt_r = logit_stats(logits_real)
        s_f, _, hinge_f, cnt_f = logit_stats(logits_fake)
        # hinge_d_loss = 0.5*(mean(relu(1-real)) + mean(relu(1+fake)))
        d_loss = cfg["disc_factor"] * 0.5 * (hinge_r / cnt_r + hinge_f / cnt_f)
        log = {
            f"{split}/loss/disc": d_loss,
            f"{split}/logits/real": s_r / cnt_r,
            f"{split}/logits/fake": s_f / cnt_f,
        }
        return d_loss, log
    else:
        raise NotImplementedError(f"Unknown optimizer_idx {optimizer_idx}")


if __name__ == "__main__":
    key = jax.random.PRNGKey(0)
    k_in, k_rec, k_disc, k_vgg, k_lin, k_frame = jax.random.split(key, 6)

    B, C, T, H, W = 2, 3, 4, 32, 32   # dims=3 (video); disc_in_channels=3
    inputs = jax.random.normal(k_in, (B, C, T, H, W), jnp.float32)
    reconstructions = inputs + 0.1 * jax.random.normal(k_rec, (B, C, T, H, W),
                                                       jnp.float32)

    params = dict(
        logvar=jnp.float32(0.0),                     # logvar_init = 0.0
        disc=make_disc_params(k_disc, input_nc=3, ndf=64, n_layers=3),
        vgg=make_vgg_params(k_vgg),
        lins=make_lin_params(k_lin),
        cfg=dict(
            disc_factor=1.0,
            discriminator_weight=1.0,
            perceptual_weight=1.0,
            disc_start=0,
            regularization_weights={"kl_loss": 1e-6},
            additional_log_keys={"kl_loss"},
        ),
    )
    reg_log = {"kl_loss": jnp.float32(0.1)}

    loss_g, log_g = general_lpips_disc_forward(
        params, inputs, reconstructions, optimizer_idx=0, global_step=0,
        regularization_log=reg_log, split="train", frame_key=k_frame)
    loss_d, log_d = general_lpips_disc_forward(
        params, inputs, reconstructions, optimizer_idx=1, global_step=0,
        regularization_log=reg_log, split="train", frame_key=k_frame)

    jax.block_until_ready((loss_g, log_g, loss_d, log_d))
    print("KERNEL_OK")
</pallas_src>

<mosaic_0001>
module attributes {stable_mosaic.version = 11 : i64} {
  func.func @_abssum_kernel(%arg0: i32, %arg1: memref<192x128xf32, #tpu.memory_space<vmem>>, %arg2: memref<192x128xf32, #tpu.memory_space<vmem>>, %arg3: memref<1x128xf32, #tpu.memory_space<vmem>>) attributes {dimension_semantics = [#tpu.dimension_semantics<parallel>], iteration_bounds = array<i64: 1>, scalar_prefetch = 0 : i64, scratch_operands = 0 : i64, tpu.core_type = #tpu.core_type<tc>, window_params = [{transform_indices = @transform_0, window_bounds = array<i64: 192, 128>}, {transform_indices = @transform_1, window_bounds = array<i64: 192, 128>}, {transform_indices = @transform_2, window_bounds = array<i64: 1, 128>}]} {
    %c0 = arith.constant 0 : index
    %c0_0 = arith.constant 0 : index
    %0 = vector.load %arg1[%c0, %c0_0] : memref<192x128xf32, #tpu.memory_space<vmem>>, vector<192x128xf32>
    %c0_1 = arith.constant 0 : index
    %c0_2 = arith.constant 0 : index
    %1 = vector.load %arg2[%c0_1, %c0_2] : memref<192x128xf32, #tpu.memory_space<vmem>>, vector<192x128xf32>
    %2 = arith.subf %0, %1 : vector<192x128xf32>
    %3 = math.absf %2 : vector<192x128xf32>
    %cst = arith.constant dense<0.000000e+00> : vector<128xf32>
    %4 = vector.multi_reduction <add>, %3, %cst [0] : vector<192x128xf32> to vector<128xf32>
    %5 = vector.shape_cast %4 : vector<128xf32> to vector<1x128xf32>
    %c0_3 = arith.constant 0 : index
    %c0_4 = arith.constant 0 : index
    %6 = vector.load %arg3[%c0_3, %c0_4] : memref<1x128xf32, #tpu.memory_space<vmem>>, vector<1x128xf32>
    tpu.vector_store %arg3[%c0_3, %c0_4], %5 {strides = array<i32>} : memref<1x128xf32, #tpu.memory_space<vmem>>, vector<1x128xf32>,
    return
  }
  func.func @transform_0(%arg0: i32) -> (i32, i32) {
    %c0_i32 = arith.constant 0 : i32
    %c0_i32_0 = arith.constant 0 : i32
    return %arg0, %c0_i32 : i32, i32
  }
  func.func @transform_1(%arg0: i32) -> (i32, i32) {
    %c0_i32 = arith.constant 0 : i32
    %c0_i32_0 = arith.constant 0 : i32
    return %arg0, %c0_i32 : i32, i32
  }
  func.func @transform_2(%arg0: i32) -> (i32, i32) {
    %c0_i32 = arith.constant 0 : i32
    %c0_i32_0 = arith.constant 0 : i32
    return %arg0, %c0_i32 : i32, i32
  }
}

</mosaic_0001>

<llo_original>
// kernel: tpu_custom_call.1
$region0: #{tpu_custom_call.1}
  #allocation0 [shape = 'u32[]', space=smem, size = 0x4, offset = 0x4, fixed_abs, tag = 'smem constant byte address 0x4 - core index']
  #allocation1 [shape = 'u32[144,128]{1,0:T(1,128)}', space=vmem, size = 0x12000, scoped, tag = 'internal scratch']
  %s0 = inlined_call_operand.hbm [shape: f32[192,128], index: 0, kind: input, shape index: {}]
  %s1 = inlined_call_operand.hbm [shape: f32[192,128], index: 1, kind: input, shape index: {}]
  %s2 = inlined_call_operand.hbm [shape: f32[1,128], index: 2, kind: output, shape index: {}]
  %s3 = sld [smem:[#allocation0]]
  $region26: #{tpu_custom_call.1} parent=0
    _
  %s5 = ssub.s32 1, %s3
  %s6 = scalar_select 0, %s5, %s3
  $region1: #{tpu_custom_call.1} parent=0
    #allocation2 [shape = 'u8[98304]{0}', space=vmem, size = 0x18000, scoped, tag = 'input window, operand 0, single buffered']
    #allocation3 [shape = 's32[1]{0}', space=sflag, size = 0x4, scoped, tag = 'scoped memory for tpu_custom_call.1']
    #allocation4 [shape = 's32[1]{0}', space=sflag, size = 0x4, scoped, tag = 'scoped memory for tpu_custom_call.1']
    #allocation5 [shape = 'u8[98304]{0}', space=vmem, size = 0x18000, scoped, tag = 'input window, operand 1, single buffered']
    #allocation6 [shape = 's32[1]{0}', space=sflag, size = 0x4, scoped, tag = 'scoped memory for tpu_custom_call.1']
    #allocation7 [shape = 'u8[512]{0}', space=vmem, size = 0x400, scoped, tag = 'output window, operand 0, single buffered']
    %7 = vsyncpa [#allocation3], 0
    %8 = vsyncpa [#allocation6], 0
    %9 = vsyncpa [#allocation4], 0
    // Predicated region
    $region2: #{tpu_custom_call.1} parent=1 // pred_check
      _
    $region3: #{tpu_custom_call.1} parent=1 // pred_check_branch
      %11 = sbr.rel (0) target = $region5
    $region4: #{tpu_custom_call.1} parent=1 // pred_region
      %s13 = ssub.s32 3072, 3072
      %14 = vsyncadd [#allocation3], %s13
      %s15 = sshll.u32 [#allocation2], 4
      %s16 = int_to_ptr.vmem [resolvable:$true] %s15
      %21 = dma.hbm_to_vmem [thread:$0]  %s0, 3072, %s16, [#allocation3], 128, 128, 8
    $region5: #{tpu_custom_call.1} parent=1 // pred_fallthru
      _
    // Predicated region
    $region6: #{tpu_custom_call.1} parent=1 // pred_check
      _
    $region7: #{tpu_custom_call.1} parent=1 // pred_check_branch
      %23 = sbr.rel (0) target = $region9
    $region8: #{tpu_custom_call.1} parent=1 // pred_region
      %s25 = ssub.s32 3072, 3072
      %26 = vsyncadd [#allocation6], %s25
      %s27 = sshll.u32 [#allocation5], 4
      %s28 = int_to_ptr.vmem [resolvable:$true] %s27
      %33 = dma.hbm_to_vmem [thread:$0]  %s1, 3072, %s28, [#allocation6], 128, 128, 8
    $region9: #{tpu_custom_call.1} parent=1 // pred_fallthru
      _
    // Predicated region
    $region10: #{tpu_custom_call.1} parent=1 // pred_check
      _
    $region11: #{tpu_custom_call.1} parent=1 // pred_check_branch
      %35 = sbr.rel (0) target = $region13
    $region12: #{tpu_custom_call.1} parent=1 // pred_region
      %36 = dma.done [#allocation3], 3072
    $region13: #{tpu_custom_call.1} parent=1 // pred_fallthru
      _
    // Predicated region
    $region14: #{tpu_custom_call.1} parent=1 // pred_check
      _
    $region15: #{tpu_custom_call.1} parent=1 // pred_check_branch
      %38 = sbr.rel (0) target = $region17
    $region16: #{tpu_custom_call.1} parent=1 // pred_region
      %39 = dma.done [#allocation6], 3072
    $region17: #{tpu_custom_call.1} parent=1 // pred_fallthru
      _
    %v40 = vld [vmem:[#allocation2] sm:$0xff]
    %v41 = vld [vmem:[#allocation2 + $0x8] sm:$0xff]
    %v42 = vld [vmem:[#allocation2 + $0x10] sm:$0xff]
    %v43 = vld [vmem:[#allocation2 + $0x18] sm:$0xff]
    %v44 = vld [vmem:[#allocation2 + $0x20] sm:$0xff]
    %v45 = vld [vmem:[#allocation2 + $0x28] sm:$0xff]
    %v46 = vld [vmem:[#allocation2 + $0x30] sm:$0xff]
    %v47 = vld [vmem:[#allocation2 + $0x38] sm:$0xff]
    %v48 = vld [vmem:[#allocation2 + $0x40] sm:$0xff]
    %v49 = vld [vmem:[#allocation2 + $0x48] sm:$0xff]
    %v50 = vld [vmem:[#allocation2 + $0x50] sm:$0xff]
    %v51 = vld [vmem:[#allocation2 + $0x58] sm:$0xff]
    %v52 = vld [vmem:[#allocation2 + $0x60] sm:$0xff]
    %v53 = vld [vmem:[#allocation2 + $0x68] sm:$0xff]
    %v54 = vld [vmem:[#allocation2 + $0x70] sm:$0xff]
    %v55 = vld [vmem:[#allocation2 + $0x78] sm:$0xff]
    %v56 = vld [vmem:[#allocation2 + $0x80] sm:$0xff]
    %v57 = vld [vmem:[#allocation2 + $0x88] sm:$0xff]
    %v58 = vld [vmem:[#allocation2 + $0x90] sm:$0xff]
    %v59 = vld [vmem:[#allocation2 + $0x98] sm:$0xff]
    %v60 = vld [vmem:[#allocation2 + $0xa0] sm:$0xff]
    %v61 = vld [vmem:[#allocation2 + $0xa8] sm:$0xff]
    %v62 = vld [vmem:[#allocation2 + $0xb0] sm:$0xff]
    %v63 = vld [vmem:[#allocation2 + $0xb8] sm:$0xff]
    %v64 = vld [vmem:[#allocation5] sm:$0xff]
    %v65 = vld [vmem:[#allocation5 + $0x8] sm:$0xff]
    %v66 = vld [vmem:[#allocation5 + $0x10] sm:$0xff]
    %v67 = vld [vmem:[#allocation5 + $0x18] sm:$0xff]
    %v68 = vld [vmem:[#allocation5 + $0x20] sm:$0xff]
    %v69 = vld [vmem:[#allocation5 + $0x28] sm:$0xff]
    %v70 = vld [vmem:[#allocation5 + $0x30] sm:$0xff]
    %v71 = vld [vmem:[#allocation5 + $0x38] sm:$0xff]
    %v72 = vld [vmem:[#allocation5 + $0x40] sm:$0xff]
    %v73 = vld [vmem:[#allocation5 + $0x48] sm:$0xff]
    %v74 = vld [vmem:[#allocation5 + $0x50] sm:$0xff]
    %v75 = vld [vmem:[#allocation5 + $0x58] sm:$0xff]
    %v76 = vld [vmem:[#allocation5 + $0x60] sm:$0xff]
    %v77 = vld [vmem:[#allocation5 + $0x68] sm:$0xff]
    %v78 = vld [vmem:[#allocation5 + $0x70] sm:$0xff]
    %v79 = vld [vmem:[#allocation5 + $0x78] sm:$0xff]
    %v80 = vld [vmem:[#allocation5 + $0x80] sm:$0xff]
    %v81 = vld [vmem:[#allocation5 + $0x88] sm:$0xff]
    %v82 = vld [vmem:[#allocation5 + $0x90] sm:$0xff]
    %v83 = vld [vmem:[#allocation5 + $0x98] sm:$0xff]
    %v84 = vld [vmem:[#allocation5 + $0xa0] sm:$0xff]
    %v85 = vld [vmem:[#allocation5 + $0xa8] sm:$0xff]
    %v86 = vld [vmem:[#allocation5 + $0xb0] sm:$0xff]
    %v87 = vld [vmem:[#allocation5 + $0xb8] sm:$0xff]
    %v88 = vsub.f32 %v40, %v64
    %v89 = vsub.f32 %v41, %v65
    %v90 = vsub.f32 %v42, %v66
    %v91 = vsub.f32 %v43, %v67
    %v92 = vsub.f32 %v44, %v68
    %v93 = vsub.f32 %v45, %v69
    %v94 = vsub.f32 %v46, %v70
    %v95 = vsub.f32 %v47, %v71
    %v96 = vsub.f32 %v48, %v72
    %v97 = vsub.f32 %v49, %v73
    %v98 = vsub.f32 %v50, %v74
    %v99 = vsub.f32 %v51, %v75
    %v100 = vsub.f32 %v52, %v76
    %v101 = vsub.f32 %v53, %v77
    %v102 = vsub.f32 %v54, %v78
    %v103 = vsub.f32 %v55, %v79
    %v104 = vsub.f32 %v56, %v80
    %v105 = vsub.f32 %v57, %v81
    %v106 = vsub.f32 %v58, %v82
    %v107 = vsub.f32 %v59, %v83
    %v108 = vsub.f32 %v60, %v84
    %v109 = vsub.f32 %v61, %v85
    %v110 = vsub.f32 %v62, %v86
    %v111 = vsub.f32 %v63, %v87
    %v112 = vand.u32 2147483647, %v88
    %v113 = vand.u32 2147483647, %v89
    %v114 = vand.u32 2147483647, %v90
    %v115 = vand.u32 2147483647, %v91
    %v116 = vand.u32 2147483647, %v92
    %v117 = vand.u32 2147483647, %v93
    %v118 = vand.u32 2147483647, %v94
    %v119 = vand.u32 2147483647, %v95
    %v120 = vand.u32 2147483647, %v96
    %v121 = vand.u32 2147483647, %v97
    %v122 = vand.u32 2147483647, %v98
    %v123 = vand.u32 2147483647, %v99
    %v124 = vand.u32 2147483647, %v100
    %v125 = vand.u32 2147483647, %v101
    %v126 = vand.u32 2147483647, %v102
    %v127 = vand.u32 2147483647, %v103
    %v128 = vand.u32 2147483647, %v104
    %v129 = vand.u32 2147483647, %v105
    %v130 = vand.u32 2147483647, %v106
    %v131 = vand.u32 2147483647, %v107
    %v132 = vand.u32 2147483647, %v108
    %v133 = vand.u32 2147483647, %v109
    %v134 = vand.u32 2147483647, %v110
    %v135 = vand.u32 2147483647, %v111
    %v136 = vadd.f32 %v112, %v113
    %v137 = vadd.f32 %v136, %v114
    %v138 = vadd.f32 %v137, %v115
    %v139 = vadd.f32 %v138, %v116
    %v140 = vadd.f32 %v139, %v117
    %v141 = vadd.f32 %v140, %v118
    %v142 = vadd.f32 %v141, %v119
    %v143 = vadd.f32 %v142, %v120
    %v144 = vadd.f32 %v143, %v121
    %v145 = vadd.f32 %v144, %v122
    %v146 = vadd.f32 %v145, %v123
    %v147 = vadd.f32 %v146, %v124
    %v148 = vadd.f32 %v147, %v125
    %v149 = vadd.f32 %v148, %v126
    %v150 = vadd.f32 %v149, %v127
    %v151 = vadd.f32 %v150, %v128
    %v152 = vadd.f32 %v151, %v129
    %v153 = vadd.f32 %v152, %v130
    %v154 = vadd.f32 %v153, %v131
    %v155 = vadd.f32 %v154, %v132
    %v156 = vadd.f32 %v155, %v133
    %v157 = vadd.f32 %v156, %v134
    %v158 = vadd.f32 %v157, %v135
    %v159 = vrot.slane %v158, 4
    %v160 = vadd.f32 %v158, %v159
    %v161 = vrot.slane %v160, 2
    %v162 = vadd.f32 %v160, %v161
    %v163 = vrot.slane %v162, 1
    %v164 = vadd.f32 %v162, %v163
    %165 = vst [vmem:[#allocation7] sm:$0x1] %v164
    // Predicated region
    $region18: #{tpu_custom_call.1} parent=1 // pred_check
      _
    $region19: #{tpu_custom_call.1} parent=1 // pred_check_branch
      %167 = sbr.rel (0) target = $region21
    $region20: #{tpu_custom_call.1} parent=1 // pred_region
      %s169 = ssub.s32 16, 16
      %170 = vsyncadd [#allocation4], %s169
      %s172 = sshll.u32 [#allocation7], 4
      %s173 = int_to_ptr.vmem [resolvable:$true] %s172
      %175 = dma.vmem_to_hbm [thread:$0]  %s173, 16, %s2, [#allocation4]
    $region21: #{tpu_custom_call.1} parent=1 // pred_fallthru
      _
    // Predicated region
    $region22: #{tpu_custom_call.1} parent=1 // pred_check
      _
    $region23: #{tpu_custom_call.1} parent=1 // pred_check_branch
      %177 = sbr.rel (0) target = $region25
    $region24: #{tpu_custom_call.1} parent=1 // pred_region
      %178 = dma.done [#allocation4], 16
    $region25: #{tpu_custom_call.1} parent=1 // pred_fallthru
      _
    %179 = vsyncpa [#allocation3], 1
    %180 = vsyncpa [#allocation6], 1
    %181 = vsyncpa [#allocation4], 1

</llo_original>
